<compile_context>
chip_gen: v5e
topology: v5e:2x2
jax: 0.10.0
libtpu: 0.0.40
codegen_flags: <defaults>
</compile_context>

<pallas_src>
import functools

import jax
import jax.numpy as jnp
from jax.experimental import pallas as pl
from jax.experimental.pallas import tpu as pltpu

LANES = 128
SUBLANES = 8


def _cdiv(a: int, b: int) -> int:
    return -(-a // b)


def _round_up(x: int, m: int) -> int:
    return _cdiv(x, m) * m


def _device_kind() -> str:
    try:
        return jax.devices()[0].device_kind.lower()
    except Exception:
        return ""


def _vmem_capacity_bytes() -> int:
    try:
        return int(pltpu.get_tpu_info().vmem_capacity_bytes)
    except Exception:
        return 64 << 20  # v7x has the smallest physical VMEM per TensorCore


def _maybe_raise_vmem_limit(cp_kwargs: dict, vmem_est: int) -> None:
    """Raise the scoped-VMEM limit only when the conservative 16 MiB default (v5e)
    would not fit, never exceeding physical VMEM minus headroom (v7x: 64 MiB)."""
    if vmem_est <= (14 << 20):
        return
    cap = _vmem_capacity_bytes()
    limit = min(max(vmem_est * 3 // 2 + (2 << 20), 32 << 20), cap - (8 << 20))
    if limit >= vmem_est:
        cp_kwargs["vmem_limit_bytes"] = int(limit)


def _single_buffered_spec(block_shape, index_map):
    """BlockSpec for a grid-invariant block: request a single VMEM buffer."""
    try:
        return pl.BlockSpec(block_shape, index_map, pipeline_mode=pl.Buffered(1))
    except (TypeError, AttributeError):
        # Older API without pipeline_mode: fall back to default double-buffering.
        return pl.BlockSpec(block_shape, index_map)


# ----------------------------------------------------------------------------
# Rhythmic loss: sum |pred - target| over a (rows, 128) slab.
# ----------------------------------------------------------------------------
def _l1_sum_kernel(p_ref, t_ref, out_ref, *, rows_total, needs_mask):
    p_idx = pl.program_id(0)          # "parallel" partials axis (megacore on v7x)
    s = pl.program_id(1)              # "arbitrary" reduction axis
    tile_rows = p_ref.shape[0]

    # Zero the resident (8,128) accumulator block at the start of each partial.
    @pl.when(s == 0)
    def _():
        out_ref[...] = jnp.zeros_like(out_ref)

    def accumulate(mask_tail):
        # f32 accumulation regardless of input dtype (v5e VPU has no bf16).
        d = jnp.abs(p_ref[...].astype(jnp.float32) - t_ref[...].astype(jnp.float32))
        if mask_tail:
            row0 = (p_idx * pl.num_programs(1) + s) * tile_rows
            rows = row0 + jax.lax.broadcasted_iota(jnp.int32, d.shape, 0)
            d = jnp.where(rows < rows_total, d, 0.0)
        # Reduce only along the tile-row axis; keep the accumulator vreg-shaped so
        # the steady state stays on the VPU (cross-lane reduce done in the wrapper).
        out_ref[...] += d.reshape(tile_rows // SUBLANES, SUBLANES, LANES).sum(axis=0)

    if needs_mask:
        # Only the overhanging tail block(s) pay for the iota + where mask.
        block = p_idx * pl.num_programs(1) + s
        tail = (block + 1) * tile_rows > rows_total

        @pl.when(jnp.logical_not(tail))
        def _():
            accumulate(False)

        @pl.when(tail)
        def _():
            accumulate(True)
    else:
        accumulate(False)


def _l1_sum(pred, target, *, tile_rows: int | None = None, num_partials: int = 2):
    """Returns sum(|pred - target|) as a float32 scalar."""
    n = pred.size
    itemsize = jnp.dtype(pred.dtype).itemsize
    flat_p = pred.reshape(-1)
    flat_t = target.reshape(-1)

    if n % LANES != 0:
        # TODO(synk): rare fallback — whole-array pad for sizes not divisible by 128;
        # the common audio / NCHW case takes the pad-free path below.
        padded = _round_up(n, LANES)
        flat_p = jnp.pad(flat_p, (0, padded - n))
        flat_t = jnp.pad(flat_t, (0, padded - n))

    rows_total = flat_p.shape[0] // LANES
    p2 = flat_p.reshape(rows_total, LANES)
    t2 = flat_t.reshape(rows_total, LANES)

    if tile_rows is None:
        # HBM-bound: go big. 8192 rows (f32) = 4 MiB/block -> 16 MiB double-buffered
        # for two inputs, fits the 32 MiB default scoped VMEM on v6e/v7x.  v5e's
        # default scoped VMEM is 16 MiB, so cap it at 4096 rows there.
        kind = _device_kind()
        is_v5e = ("v5 lite" in kind) or ("v5e" in kind) or ("v5lite" in kind)
        tile_rows = 4096 if is_v5e else 8192
    tile_rows = min(_round_up(max(tile_rows, SUBLANES), SUBLANES),
                    _round_up(rows_total, SUBLANES))
    row_tiles = _cdiv(rows_total, tile_rows)

    # Leading "parallel" partial axis: on v7x each TensorCore reduces half the rows
    # into its own (8,128) partial; on v5e/v6e it just runs sequentially.
    num_partials = max(1, min(num_partials, row_tiles))
    steps = _cdiv(row_tiles, num_partials)
    needs_mask = (num_partials * steps * tile_rows) != rows_total
    last_block = row_tiles - 1

    kernel = functools.partial(_l1_sum_kernel,
                               rows_total=rows_total, needs_mask=needs_mask)

    # Clamp the block index so overhanging grid steps never DMA past the array;
    # the kernel masks their (re-read) contribution to zero.
    def in_map(p, s):
        return (jnp.minimum(p * steps + s, last_block), 0)

    cost = pl.CostEstimate(
        flops=2 * n,
        transcendentals=0,
        bytes_accessed=2 * n * itemsize + num_partials * SUBLANES * LANES * 4,
    )

    cp_kwargs = dict(dimension_semantics=("parallel", "arbitrary"))
    vmem_est = (2 * 2 * tile_rows * LANES * itemsize
                + num_partials * SUBLANES * LANES * 4)
    _maybe_raise_vmem_limit(cp_kwargs, vmem_est)

    partials = pl.pallas_call(
        kernel,
        out_shape=jax.ShapeDtypeStruct((num_partials * SUBLANES, LANES), jnp.float32),
        grid_spec=pltpu.PrefetchScalarGridSpec(
            num_scalar_prefetch=0,
            grid=(num_partials, steps),
            in_specs=[
                pl.BlockSpec((tile_rows, LANES), in_map),
                pl.BlockSpec((tile_rows, LANES), in_map),
            ],
            out_specs=pl.BlockSpec((SUBLANES, LANES), lambda p, s: (p, 0)),
        ),
        compiler_params=pltpu.CompilerParams(**cp_kwargs),
        cost_estimate=cost,
    )(p2, t2)

    return jnp.sum(partials)


# ----------------------------------------------------------------------------
# Harmonic + Timbre losses: fused STFT-magnitude L1 and squared-error sums.
# Inputs are overlapping frames; the DFT is a bf16 matmul against [cos | -sin].
# ----------------------------------------------------------------------------
def _stft_mag_loss_kernel(fp_ref, ft_ref, cs_ref, l1_ref, sq_ref, *,
                          rows_total, needs_mask):
    p_idx = pl.program_id(0)          # "parallel" partials axis
    s = pl.program_id(1)              # "arbitrary" frame-tile axis
    tile_rows = fp_ref.shape[0]
    f_pad = cs_ref.shape[1] // 2

    @pl.when(s == 0)
    def _():
        l1_ref[...] = jnp.zeros_like(l1_ref)
        sq_ref[...] = jnp.zeros_like(sq_ref)

    cs = cs_ref[...]                  # (n_fft, 2*f_pad) bf16, VMEM-resident
    # bf16 x bf16 MXU matmuls with f32 accumulation; 2 dots instead of 4.
    z_p = jnp.dot(fp_ref[...], cs, preferred_element_type=jnp.float32)
    z_t = jnp.dot(ft_ref[...], cs, preferred_element_type=jnp.float32)

    re_p, im_p = z_p[:, :f_pad], z_p[:, f_pad:]     # lane-aligned static slices
    re_t, im_t = z_t[:, :f_pad], z_t[:, f_pad:]
    mag_p = jnp.sqrt(re_p * re_p + im_p * im_p)
    mag_t = jnp.sqrt(re_t * re_t + im_t * im_t)
    d = mag_p - mag_t

    if needs_mask:  # mask frame rows from the grid overhang (unspecified data)
        row0 = (p_idx * pl.num_programs(1) + s) * tile_rows
        rows = row0 + jax.lax.broadcasted_iota(jnp.int32, d.shape, 0)
        d = jnp.where(rows < rows_total, d, 0.0)

    l1_ref[...] += jnp.abs(d).reshape(tile_rows // SUBLANES, SUBLANES, f_pad).sum(axis=0)
    sq_ref[...] += (d * d).reshape(tile_rows // SUBLANES, SUBLANES, f_pad).sum(axis=0)


def _stft_mag_losses(pred, target, *, n_fft: int, hop_length: int,
                     tile_rows: int | None = None, num_partials: int = 2):
    """Returns (mean |mag_p - mag_t|, mean (mag_p - mag_t)^2) as float32 scalars."""
    L = pred.shape[-1]
    pad = n_fft // 2
    assert L > pad, "signal too short for torch.stft-style reflect padding"

    # Reflect-pad and frame in the JAX wrapper (no FFT primitive in Pallas; the DFT
    # is a matmul).  Frames are materialised in bf16 — they feed bf16 MXU matmuls —
    # which halves the framed-copy HBM traffic.
    # TODO(synk): frame inside the kernel from the padded signal (memory_space=pl.ANY
    # + manual async_copy) to remove the n_fft/hop-times expanded HBM copy entirely.
    p = pred.reshape(-1, L).astype(jnp.bfloat16)
    t = target.reshape(-1, L).astype(jnp.bfloat16)
    batch = p.shape[0]
    p = jnp.pad(p, ((0, 0), (pad, pad)), mode="reflect")
    t = jnp.pad(t, ((0, 0), (pad, pad)), mode="reflect")

    n_frames = 1 + (L + 2 * pad - n_fft) // hop_length
    frame_idx = (jnp.arange(n_frames)[:, None] * hop_length
                 + jnp.arange(n_fft)[None, :])
    rows_total = batch * n_frames
    fp = p[:, frame_idx].reshape(rows_total, n_fft)
    ft = t[:, frame_idx].reshape(rows_total, n_fft)

    # Real-DFT matrices, [cos | -sin] concatenated so only 2 dots per input are
    # issued.  Frequency axis zero-padded to a multiple of 128 lanes (padded columns
    # are all-zero -> zero magnitude for both inputs -> no effect on the sums).
    n_freq = n_fft // 2 + 1
    f_pad = _round_up(n_freq, LANES)
    k = jnp.arange(n_fft, dtype=jnp.float32)[:, None]
    f = jnp.arange(f_pad, dtype=jnp.float32)[None, :]
    ang = 2.0 * jnp.pi * k * f / float(n_fft)
    valid = (jnp.arange(f_pad) < n_freq)[None, :]
    cos_m = jnp.where(valid, jnp.cos(ang), 0.0)
    sin_m = jnp.where(valid, -jnp.sin(ang), 0.0)
    cs = jnp.concatenate([cos_m, sin_m], axis=1).astype(jnp.bfloat16)

    if tile_rows is None:
        # ~1 MiB of bf16 frames per block: 256 rows at n_fft=2048 (fills the
        # 256-wide v6e/v7x MXUs), more for smaller n_fft.
        tile_rows = max(256, (1 << 20) // (2 * n_fft))
    tile_rows = min(_round_up(max(tile_rows, SUBLANES), SUBLANES),
                    _round_up(rows_total, SUBLANES))
    row_tiles = _cdiv(rows_total, tile_rows)

    num_partials = max(1, min(num_partials, row_tiles))
    steps = _cdiv(row_tiles, num_partials)
    needs_mask = (num_partials * steps * tile_rows) != rows_total
    last_block = row_tiles - 1

    kernel = functools.partial(_stft_mag_loss_kernel,
                               rows_total=rows_total, needs_mask=needs_mask)

    def frame_map(p_, s_):
        return (jnp.minimum(p_ * steps + s_, last_block), 0)

    cost = pl.CostEstimate(
        flops=8 * rows_total * n_fft * f_pad,
        transcendentals=2 * rows_total * f_pad,
        bytes_accessed=(2 * (2 * rows_total * n_fft + n_fft * 2 * f_pad)
                        + 2 * num_partials * SUBLANES * f_pad * 4),
    )

    cp_kwargs = dict(dimension_semantics=("parallel", "arbitrary"))
    vmem_est = (2 * 2 * tile_rows * n_fft * 2        # 2 frame inputs, double-buffered
                + 2 * n_fft * 2 * f_pad * 2          # cos|sin (worst case 2 buffers)
                + 2 * num_partials * SUBLANES * f_pad * 4)
    _maybe_raise_vmem_limit(cp_kwargs, vmem_est)

    l1_part, sq_part = pl.pallas_call(
        kernel,
        out_shape=(jax.ShapeDtypeStruct((num_partials * SUBLANES, f_pad), jnp.float32),
                   jax.ShapeDtypeStruct((num_partials * SUBLANES, f_pad), jnp.float32)),
        grid_spec=pltpu.PrefetchScalarGridSpec(
            num_scalar_prefetch=0,
            grid=(num_partials, steps),
            in_specs=[
                pl.BlockSpec((tile_rows, n_fft), frame_map),
                pl.BlockSpec((tile_rows, n_fft), frame_map),
                _single_buffered_spec((n_fft, 2 * f_pad), lambda p_, s_: (0, 0)),
            ],
            out_specs=[
                pl.BlockSpec((SUBLANES, f_pad), lambda p_, s_: (p_, 0)),
                pl.BlockSpec((SUBLANES, f_pad), lambda p_, s_: (p_, 0)),
            ],
        ),
        compiler_params=pltpu.CompilerParams(**cp_kwargs),
        cost_estimate=cost,
    )(fp, ft, cs)

    count = rows_total * n_freq
    harmonic = jnp.sum(l1_part) / count   # mean L1 of STFT magnitudes
    timbre = jnp.sum(sq_part) / count     # mean MSE of STFT magnitudes
    return harmonic, timbre


# ----------------------------------------------------------------------------
# Public API mirroring the PyTorch modules.
# ----------------------------------------------------------------------------
def rhythmic_loss(pred, target):
    return _l1_sum(pred, target) / pred.size


def harmonic_loss(pred, target, *, n_fft=2048, hop_length=512):
    return _stft_mag_losses(pred, target, n_fft=n_fft, hop_length=hop_length)[0]


def timbre_loss(pred, target, *, n_fft=2048, hop_length=512):
    return _stft_mag_losses(pred, target, n_fft=n_fft, hop_length=hop_length)[1]


def music_loss(pred, target, *, sample_rate=44100, n_fft=2048, hop_length=512,
               harmonic_weight=1.0, rhythmic_weight=1.0, timbre_weight=1.0):
    """Pallas equivalent of MusicLoss.forward(pred, target)."""
    del sample_rate  # unused (as in the PyTorch module)
    assert pred.shape == target.shape, "pred/target must have the same shape"
    rhythmic = _l1_sum(pred, target) / pred.size
    # Harmonic (L1) and timbre (MSE) share one fused STFT-magnitude kernel call.
    harmonic, timbre = _stft_mag_losses(pred, target, n_fft=n_fft,
                                        hop_length=hop_length)
    return (harmonic_weight * harmonic
            + rhythmic_weight * rhythmic
            + timbre_weight * timbre)


# ----------------------------------------------------------------------------
# Plain-JAX reference (same math as torch: rect window, center/reflect, onesided).
# ----------------------------------------------------------------------------
def _reference_music_loss(pred, target, *, n_fft, hop_length,
                          harmonic_weight=1.0, rhythmic_weight=1.0,
                          timbre_weight=1.0):
    def mags(x):
        L = x.shape[-1]
        x2 = x.reshape(-1, L).astype(jnp.float32)
        pad = n_fft // 2
        xp = jnp.pad(x2, ((0, 0), (pad, pad)), mode="reflect")
        n_frames = 1 + (L + 2 * pad - n_fft) // hop_length
        idx = jnp.arange(n_frames)[:, None] * hop_length + jnp.arange(n_fft)[None, :]
        frames = xp[:, idx]
        k = jnp.arange(n_fft, dtype=jnp.float32)[:, None]
        f = jnp.arange(n_fft // 2 + 1, dtype=jnp.float32)[None, :]
        ang = 2.0 * jnp.pi * k * f / float(n_fft)
        re = jnp.matmul(frames, jnp.cos(ang), precision=jax.lax.Precision.HIGHEST)
        im = jnp.matmul(frames, -jnp.sin(ang), precision=jax.lax.Precision.HIGHEST)
        return jnp.sqrt(re * re + im * im)

    mp, mt = mags(pred), mags(target)
    harmonic = jnp.mean(jnp.abs(mp - mt))
    timbre = jnp.mean((mp - mt) ** 2)
    rhythmic = jnp.mean(jnp.abs(pred.astype(jnp.float32) - target.astype(jnp.float32)))
    return harmonic_weight * harmonic + rhythmic_weight * rhythmic + timbre_weight * timbre


if __name__ == "__main__":
    key = jax.random.PRNGKey(0)
    k1, k2 = jax.random.split(key)

    # Small "audio" batch: (batch=2, channels=4, samples=1024) with a scaled-down
    # STFT config (n_fft=128, hop=32) so the whole test stays tiny.
    shape = (2, 4, 1024)
    n_fft, hop_length = 128, 32
    pred = jax.random.normal(k1, shape, dtype=jnp.float32)
    target = jax.random.normal(k2, shape, dtype=jnp.float32)

    loss = music_loss(pred, target, sample_rate=16000,
                      n_fft=n_fft, hop_length=hop_length)
    loss = jax.block_until_ready(loss)

    ref = _reference_music_loss(pred, target, n_fft=n_fft, hop_length=hop_length)
    ref = jax.block_until_ready(ref)

    assert bool(jnp.isfinite(loss)), loss
    assert jnp.allclose(loss, ref, rtol=2e-2, atol=2e-2), (loss, ref)
    print("KERNEL_OK")
</pallas_src>

<mosaic_0001>
module attributes {stable_mosaic.version = 11 : i64} {
  func.func @_l1_sum_kernel(%arg0: i32, %arg1: i32, %arg2: memref<64x128xf32, #tpu.memory_space<vmem>>, %arg3: memref<64x128xf32, #tpu.memory_space<vmem>>, %arg4: memref<8x128xf32, #tpu.memory_space<vmem>>) attributes {dimension_semantics = [#tpu.dimension_semantics<parallel>, #tpu.dimension_semantics<arbitrary>], iteration_bounds = array<i64: 1, 1>, scalar_prefetch = 0 : i64, scratch_operands = 0 : i64, tpu.core_type = #tpu.core_type<tc>, window_params = [{transform_indices = @transform_0, window_bounds = array<i64: 64, 128>}, {transform_indices = @transform_1, window_bounds = array<i64: 64, 128>}, {transform_indices = @transform_2, window_bounds = array<i64: 8, 128>}]} {
    %c0_i32 = arith.constant 0 : i32
    %0 = arith.cmpi eq, %arg1, %c0_i32 : i32
    %1 = arith.extui %0 : i1 to i32
    %c0_i32_0 = arith.constant 0 : i32
    %2 = arith.cmpi ne, %1, %c0_i32_0 : i32
    scf.if %2 {
      %cst_8 = arith.constant 0.000000e+00 : f32
      %12 = vector.broadcast %cst_8 : f32 to vector<8x128xf32>
      %c0_9 = arith.constant 0 : index
      %c0_10 = arith.constant 0 : index
      %13 = vector.load %arg4[%c0_9, %c0_10] : memref<8x128xf32, #tpu.memory_space<vmem>>, vector<8x128xf32>
      tpu.vector_store %arg4[%c0_9, %c0_10], %12 {strides = array<i32>} : memref<8x128xf32, #tpu.memory_space<vmem>>, vector<8x128xf32>,
    } else {
    }
    %c0 = arith.constant 0 : index
    %c0_1 = arith.constant 0 : index
    %3 = vector.load %arg2[%c0, %c0_1] : memref<64x128xf32, #tpu.memory_space<vmem>>, vector<64x128xf32>
    %c0_2 = arith.constant 0 : index
    %c0_3 = arith.constant 0 : index
    %4 = vector.load %arg3[%c0_2, %c0_3] : memref<64x128xf32, #tpu.memory_space<vmem>>, vector<64x128xf32>
    %5 = arith.subf %3, %4 : vector<64x128xf32>
    %6 = math.absf %5 : vector<64x128xf32>
    %c0_4 = arith.constant 0 : index
    %c0_5 = arith.constant 0 : index
    %7 = vector.load %arg4[%c0_4, %c0_5] : memref<8x128xf32, #tpu.memory_space<vmem>>, vector<8x128xf32>
    %8 = vector.shape_cast %6 : vector<64x128xf32> to vector<8x8x128xf32>
    %cst = arith.constant dense<0.000000e+00> : vector<8x128xf32>
    %9 = vector.multi_reduction <add>, %8, %cst [0] : vector<8x8x128xf32> to vector<8x128xf32>
    %10 = arith.addf %7, %9 : vector<8x128xf32>
    %c0_6 = arith.constant 0 : index
    %c0_7 = arith.constant 0 : index
    %11 = vector.load %arg4[%c0_6, %c0_7] : memref<8x128xf32, #tpu.memory_space<vmem>>, vector<8x128xf32>
    tpu.vector_store %arg4[%c0_6, %c0_7], %10 {strides = array<i32>} : memref<8x128xf32, #tpu.memory_space<vmem>>, vector<8x128xf32>,
    return
  }
  func.func @transform_0(%arg0: i32, %arg1: i32) -> (i32, i32) {
    %c1_i32 = arith.constant 1 : i32
    %0 = arith.muli %arg0, %c1_i32 : i32
    %1 = arith.addi %0, %arg1 : i32
    %c0_i32 = arith.constant 0 : i32
    %2 = arith.minsi %1, %c0_i32 : i32
    %c0_i32_0 = arith.constant 0 : i32
    %c0_i32_1 = arith.constant 0 : i32
    return %2, %c0_i32_0 : i32, i32
  }
  func.func @transform_1(%arg0: i32, %arg1: i32) -> (i32, i32) {
    %c1_i32 = arith.constant 1 : i32
    %0 = arith.muli %arg0, %c1_i32 : i32
    %1 = arith.addi %0, %arg1 : i32
    %c0_i32 = arith.constant 0 : i32
    %2 = arith.minsi %1, %c0_i32 : i32
    %c0_i32_0 = arith.constant 0 : i32
    %c0_i32_1 = arith.constant 0 : i32
    return %2, %c0_i32_0 : i32, i32
  }
  func.func @transform_2(%arg0: i32, %arg1: i32) -> (i32, i32) {
    %c0_i32 = arith.constant 0 : i32
    %c0_i32_0 = arith.constant 0 : i32
    return %arg0, %c0_i32 : i32, i32
  }
}

</mosaic_0001>

<llo_original>
// kernel: tpu_custom_call.1
$region0: #{tpu_custom_call.1}
  #allocation0 [shape = 'u32[]', space=smem, size = 0x4, offset = 0x4, fixed_abs, tag = 'smem constant byte address 0x4 - core index']
  #allocation1 [shape = 'u32[72,128]{1,0:T(1,128)}', space=vmem, size = 0x9000, scoped, tag = 'internal scratch']
  %s0 = inlined_call_operand.hbm [shape: f32[64,128], index: 0, kind: input, shape index: {}]
  %s1 = inlined_call_operand.hbm [shape: f32[64,128], index: 1, kind: input, shape index: {}]
  %s2 = inlined_call_operand.hbm [shape: f32[8,128], index: 2, kind: output, shape index: {}]
  %s3 = sld [smem:[#allocation0]]
  $region30: #{tpu_custom_call.1} parent=0
    _
  %s5 = ssub.s32 1, %s3
  %s6 = scalar_select 0, %s5, %s3
  $region1: #{tpu_custom_call.1} parent=0
    #allocation2 [shape = 'u8[32768]{0}', space=vmem, size = 0x8000, scoped, tag = 'input window, operand 0, single buffered']
    #allocation3 [shape = 's32[1]{0}', space=sflag, size = 0x4, scoped, tag = 'scoped memory for tpu_custom_call.1']
    #allocation4 [shape = 's32[1]{0}', space=sflag, size = 0x4, scoped, tag = 'scoped memory for tpu_custom_call.1']
    #allocation5 [shape = 'u8[32768]{0}', space=vmem, size = 0x8000, scoped, tag = 'input window, operand 1, single buffered']
    #allocation6 [shape = 's32[1]{0}', space=sflag, size = 0x4, scoped, tag = 'scoped memory for tpu_custom_call.1']
    #allocation7 [shape = 'u8[4096]{0}', space=vmem, size = 0x1000, scoped, tag = 'output window, operand 0, single buffered']
    %7 = vsyncpa [#allocation3], 0
    %8 = vsyncpa [#allocation6], 0
    %9 = vsyncpa [#allocation4], 0
    // Predicated region
    $region2: #{tpu_custom_call.1} parent=1 // pred_check
      _
    $region3: #{tpu_custom_call.1} parent=1 // pred_check_branch
      %11 = sbr.rel (0) target = $region5
    $region4: #{tpu_custom_call.1} parent=1 // pred_region
      %s12 = sadd.s32 0, 0
      %p13 = scmp.lt.s32.totalorder %s12, 0
      %s14 = scalar_select %p13, %s12, 0
      %s15 = smul.u32 8, %s14
      %17 = vsyncadd [#allocation3], 0
      %s18 = smul.addr %s15, 8
      %s19 = scalar_lea.hbm %s0, %s18
      %s20 = sshll.u32 %s19, 4
      %s21 = int_to_ptr.hbm [resolvable:$true] %s20
      %s22 = sshll.u32 [#allocation2], 4
      %s23 = int_to_ptr.vmem [resolvable:$true] %s22
      %28 = dma.hbm_to_vmem [thread:$0]  %s21, 1024, %s23, [#allocation3], 128, 128, 8
    $region5: #{tpu_custom_call.1} parent=1 // pred_fallthru
      _
    // Predicated region
    $region6: #{tpu_custom_call.1} parent=1 // pred_check
      _
    $region7: #{tpu_custom_call.1} parent=1 // pred_check_branch
      %30 = sbr.rel (0) target = $region9
    $region8: #{tpu_custom_call.1} parent=1 // pred_region
      %s31 = sadd.s32 0, 0
      %p32 = scmp.lt.s32.totalorder %s31, 0
      %s33 = scalar_select %p32, %s31, 0
      %s34 = smul.u32 8, %s33
      %36 = vsyncadd [#allocation6], 0
      %s37 = smul.addr %s34, 8
      %s38 = scalar_lea.hbm %s1, %s37
      %s39 = sshll.u32 %s38, 4
      %s40 = int_to_ptr.hbm [resolvable:$true] %s39
      %s41 = sshll.u32 [#allocation5], 4
      %s42 = int_to_ptr.vmem [resolvable:$true] %s41
      %47 = dma.hbm_to_vmem [thread:$0]  %s40, 1024, %s42, [#allocation6], 128, 128, 8
    $region9: #{tpu_custom_call.1} parent=1 // pred_fallthru
      _
    // Predicated region
    $region10: #{tpu_custom_call.1} parent=1 // pred_check
      _
    $region11: #{tpu_custom_call.1} parent=1 // pred_check_branch
      %49 = sbr.rel (0) target = $region13
    $region12: #{tpu_custom_call.1} parent=1 // pred_region
      %51 = dma.done [#allocation3], 1024
    $region13: #{tpu_custom_call.1} parent=1 // pred_fallthru
      _
    // Predicated region
    $region14: #{tpu_custom_call.1} parent=1 // pred_check
      _
    $region15: #{tpu_custom_call.1} parent=1 // pred_check_branch
      %53 = sbr.rel (0) target = $region17
    $region16: #{tpu_custom_call.1} parent=1 // pred_region
      %55 = dma.done [#allocation6], 1024
    $region17: #{tpu_custom_call.1} parent=1 // pred_fallthru
      _
    %s56 = sadd.s32 0, 0
    %p57 = scmp.lt.s32.totalorder %s56, 0
    %s58 = scalar_select %p57, %s56, 0
    %s59 = smul.u32 8, %s58
    %s60 = sadd.s32 0, 0
    %p61 = scmp.lt.s32.totalorder %s60, 0
    %s62 = scalar_select %p61, %s60, 0
    %s63 = smul.u32 8, %s62
    %p64 = scmp.eq.s32.totalorder 0, 0
    // Predicated region
    $region18: #{tpu_custom_call.1} parent=1 // pred_check
      %p65 = pneg %p64
    $region19: #{tpu_custom_call.1} parent=1 // pred_check_branch
      %67 = sbr.rel (%p65) target = $region21
    $region20: #{tpu_custom_call.1} parent=1 // pred_region
      %68 = vst [vmem:[#allocation7] sm:$0xff] 0.0
    $region21: #{tpu_custom_call.1} parent=1 // pred_fallthru
      _
    %v69 = vld [vmem:[#allocation2] sm:$0xff]
    %v70 = vld [vmem:[#allocation2 + $0x8] sm:$0xff]
    %v71 = vld [vmem:[#allocation2 + $0x10] sm:$0xff]
    %v72 = vld [vmem:[#allocation2 + $0x18] sm:$0xff]
    %v73 = vld [vmem:[#allocation2 + $0x20] sm:$0xff]
    %v74 = vld [vmem:[#allocation2 + $0x28] sm:$0xff]
    %v75 = vld [vmem:[#allocation2 + $0x30] sm:$0xff]
    %v76 = vld [vmem:[#allocation2 + $0x38] sm:$0xff]
    %v77 = vld [vmem:[#allocation5] sm:$0xff]
    %v78 = vld [vmem:[#allocation5 + $0x8] sm:$0xff]
    %v79 = vld [vmem:[#allocation5 + $0x10] sm:$0xff]
    %v80 = vld [vmem:[#allocation5 + $0x18] sm:$0xff]
    %v81 = vld [vmem:[#allocation5 + $0x20] sm:$0xff]
    %v82 = vld [vmem:[#allocation5 + $0x28] sm:$0xff]
    %v83 = vld [vmem:[#allocation5 + $0x30] sm:$0xff]
    %v84 = vld [vmem:[#allocation5 + $0x38] sm:$0xff]
    %v85 = vsub.f32 %v69, %v77
    %v86 = vsub.f32 %v70, %v78
    %v87 = vsub.f32 %v71, %v79
    %v88 = vsub.f32 %v72, %v80
    %v89 = vsub.f32 %v73, %v81
    %v90 = vsub.f32 %v74, %v82
    %v91 = vsub.f32 %v75, %v83
    %v92 = vsub.f32 %v76, %v84
    %v93 = vand.u32 2147483647, %v85
    %v94 = vand.u32 2147483647, %v86
    %v95 = vand.u32 2147483647, %v87
    %v96 = vand.u32 2147483647, %v88
    %v97 = vand.u32 2147483647, %v89
    %v98 = vand.u32 2147483647, %v90
    %v99 = vand.u32 2147483647, %v91
    %v100 = vand.u32 2147483647, %v92
    %v101 = vld [vmem:[#allocation7] sm:$0xff]
    %v102 = vadd.f32 %v93, %v94
    %v103 = vadd.f32 %v102, %v95
    %v104 = vadd.f32 %v103, %v96
    %v105 = vadd.f32 %v104, %v97
    %v106 = vadd.f32 %v105, %v98
    %v107 = vadd.f32 %v106, %v99
    %v108 = vadd.f32 %v107, %v100
    %v109 = vadd.f32 %v101, %v108
    %110 = vst [vmem:[#allocation7] sm:$0xff] %v109
    // Predicated region
    $region22: #{tpu_custom_call.1} parent=1 // pred_check
      _
    $region23: #{tpu_custom_call.1} parent=1 // pred_check_branch
      %112 = sbr.rel (0) target = $region25
    $region24: #{tpu_custom_call.1} parent=1 // pred_region
      %114 = vsyncadd [#allocation4], 0
      %s116 = sshll.u32 [#allocation7], 4
      %s117 = int_to_ptr.vmem [resolvable:$true] %s116
      %s118 = sshll.u32 %s2, 4
      %s119 = int_to_ptr.hbm [resolvable:$true] %s118
      %121 = dma.vmem_to_hbm [thread:$0]  %s117, 128, %s119, [#allocation4]
    $region25: #{tpu_custom_call.1} parent=1 // pred_fallthru
      _
    // Predicated region
    $region26: #{tpu_custom_call.1} parent=1 // pred_check
      _
    $region27: #{tpu_custom_call.1} parent=1 // pred_check_branch
      %123 = sbr.rel (0) target = $region29
    $region28: #{tpu_custom_call.1} parent=1 // pred_region
      %125 = dma.done [#allocation4], 128
    $region29: #{tpu_custom_call.1} parent=1 // pred_fallthru
      _
    %126 = vsyncpa [#allocation3], 1
    %127 = vsyncpa [#allocation6], 1
    %128 = vsyncpa [#allocation4], 1

</llo_original>
